<compile_context>
chip_gen: v7x
topology: tpu7x:2x2x1
jax: 0.10.0
libtpu: 0.0.40
codegen_flags: <defaults>
</compile_context>

<pallas_src>
import jax
import jax.numpy as jnp
from jax.experimental import pallas as pl
from jax.experimental.pallas import tpu as pltpu

IN_DIM = 768
HID = 256
OUT_PAD = 128          # lane-dense padded output width (>= n_labels)
TASK = "emotion"
TASKS_TO_N_LABELS = {"polarity": 3, "subjectivity": 1, "emotion": 7}
N_LABELS = TASKS_TO_N_LABELS[TASK]


def mlp_kernel(x_ref, w1_ref, b1_ref, w2_ref, b2_ref, w3_ref, b3_ref,
               wf_ref, bf_ref, o_ref):
    # In-kernel f32 -> bf16 cast of the activations (x arrives in HBM-native
    # f32; no wrapper-side convert pass).
    x = x_ref[...].astype(jnp.bfloat16)
    # linear_layer: 768 -> 256  (bf16 operands, f32 MXU accumulation, f32 bias)
    h = jnp.dot(x, w1_ref[...],
                preferred_element_type=jnp.float32) + b1_ref[...]
    # hidden_layers[0]: 256 -> 256   (Dropout(0.4) after it is identity at eval)
    h = jnp.dot(h.astype(jnp.bfloat16), w2_ref[...],
                preferred_element_type=jnp.float32) + b2_ref[...]
    # hidden_layers[1]: 256 -> 256
    h = jnp.dot(h.astype(jnp.bfloat16), w3_ref[...],
                preferred_element_type=jnp.float32) + b3_ref[...]
    # final_dropout (identity at eval) + final_layer: 256 -> 128 (zero-padded)
    o_ref[...] = (jnp.dot(h.astype(jnp.bfloat16), wf_ref[...],
                          preferred_element_type=jnp.float32)
                  + bf_ref[...]).astype(o_ref.dtype)


def prepare_params(params):
    """One-time param prep (hoisted out of the per-call forward):
    bf16 weight casts + zero-padding the final layer to 128 lanes."""
    w1, b1, w2, b2, w3, b3, wf, bf = params
    n_labels = wf.shape[1]
    wf_p = jnp.zeros((HID, OUT_PAD), jnp.float32).at[:, :n_labels].set(wf)
    bf_p = jnp.zeros((1, OUT_PAD), jnp.float32).at[:, :n_labels].set(bf)
    prep = (w1.astype(jnp.bfloat16), b1.astype(jnp.float32),
            w2.astype(jnp.bfloat16), b2.astype(jnp.float32),
            w3.astype(jnp.bfloat16), b3.astype(jnp.float32),
            wf_p.astype(jnp.bfloat16), bf_p)
    return prep, n_labels


def mlp_forward(x, prepared, *, tile_b=512, out_dtype=jnp.bfloat16):
    """x: (B, 768) float32; prepared = prepare_params(params).

    Returns (B, n_labels) logits in `out_dtype` (bf16 by default; pass
    jnp.float32 to match the PyTorch module's output dtype exactly).
    """
    (w1, b1, w2, b2, w3, b3, wf_p, bf_p), n_labels = prepared
    B = x.shape[0]

    # Batch tiling: tile_b stays a multiple of 8 (sublane alignment).  Ragged
    # tails are handled by Pallas partial blocks (masked output stores) --
    # correct here because each output row depends only on its own input row.
    tile_b = max(8, min(tile_b, pl.cdiv(B, 8) * 8))
    # Keep the grid at >= 2 steps when possible so the "parallel" batch axis
    # can shard across v7x's two TensorCores (cheap no-op elsewhere).
    if B > 8:
        tile_b = min(tile_b, max(8, pl.cdiv(pl.cdiv(B, 2), 8) * 8))
    grid = (pl.cdiv(B, tile_b),)

    out_itemsize = jnp.dtype(out_dtype).itemsize
    flops = 2 * B * (IN_DIM * HID + HID * HID + HID * HID + HID * OUT_PAD)
    bytes_accessed = (
        B * IN_DIM * 4                                        # f32 x (native)
        + (w1.size + w2.size + w3.size + wf_p.size) * 2       # bf16 weights
        + (b1.size + b2.size + b3.size + bf_p.size) * 4       # f32 biases
        + B * OUT_PAD * out_itemsize)                         # output slab

    def wspec(shape):
        # Whole-array block, same block index every grid step -> VMEM-resident.
        return pl.BlockSpec(shape, lambda i: (0,) * len(shape))

    out = pl.pallas_call(
        mlp_kernel,
        out_shape=jax.ShapeDtypeStruct((B, OUT_PAD), out_dtype),
        grid=grid,
        in_specs=[
            pl.BlockSpec((tile_b, IN_DIM), lambda i: (i, 0)),   # x tile over batch
            wspec((IN_DIM, HID)), wspec((1, HID)),
            wspec((HID, HID)),    wspec((1, HID)),
            wspec((HID, HID)),    wspec((1, HID)),
            wspec((HID, OUT_PAD)), wspec((1, OUT_PAD)),
        ],
        out_specs=pl.BlockSpec((tile_b, OUT_PAD), lambda i: (i, 0)),
        compiler_params=pltpu.CompilerParams(
            dimension_semantics=("parallel",)),
        cost_estimate=pl.CostEstimate(
            flops=flops, transcendentals=0, bytes_accessed=bytes_accessed),
    )(x, w1, b1, w2, b2, w3, b3, wf_p, bf_p)

    # Only the column slice remains (n_labels of the 128 padded lanes); the
    # row dimension is already exactly B thanks to the ragged grid.
    return out[:, :n_labels]


def init_params(key):
    """Deterministic PyTorch-style Linear init: U(-1/sqrt(fan_in), 1/sqrt(fan_in))."""
    def linear(k, fan_in, fan_out):
        kw, kb = jax.random.split(k)
        bound = 1.0 / (fan_in ** 0.5)
        w = jax.random.uniform(kw, (fan_in, fan_out), jnp.float32, -bound, bound)
        b = jax.random.uniform(kb, (1, fan_out), jnp.float32, -bound, bound)
        return w, b

    k1, k2, k3, k4 = jax.random.split(key, 4)
    w1, b1 = linear(k1, IN_DIM, HID)
    w2, b2 = linear(k2, HID, HID)
    w3, b3 = linear(k3, HID, HID)
    wf, bf = linear(k4, HID, N_LABELS)
    return (w1, b1, w2, b2, w3, b3, wf, bf)


def mlp_reference_bf16(x, params):
    """Reference with the same bf16-operand / f32-accumulate numerics."""
    w1, b1, w2, b2, w3, b3, wf, bf = params

    def lin(h, w, b):
        return jnp.dot(h.astype(jnp.bfloat16), w.astype(jnp.bfloat16),
                       preferred_element_type=jnp.float32) + b

    h = lin(x, w1, b1)
    h = lin(h, w2, b2)
    h = lin(h, w3, b3)
    return lin(h, wf, bf)


def mlp_reference_f32(x, params):
    w1, b1, w2, b2, w3, b3, wf, bf = params
    h = x @ w1 + b1
    h = h @ w2 + b2
    h = h @ w3 + b3
    return h @ wf + bf


if __name__ == "__main__":
    key = jax.random.PRNGKey(0)
    k_params, k_x1, k_x2 = jax.random.split(key, 3)

    params = init_params(k_params)
    prepared = prepare_params(params)          # one-time weight prep (hoisted)

    # Small, tile-aligned batch (bf16 output path).
    B1 = 8
    x1 = jax.random.normal(k_x1, (B1, IN_DIM), jnp.float32)
    out1 = jax.block_until_ready(mlp_forward(x1, prepared))
    assert out1.shape == (B1, N_LABELS), out1.shape
    assert out1.dtype == jnp.bfloat16, out1.dtype
    ref1 = mlp_reference_bf16(x1, params)
    assert jnp.allclose(out1.astype(jnp.float32), ref1, atol=2e-2, rtol=2e-2), \
        "mismatch (B=8) vs bf16 reference"
    assert jnp.allclose(out1.astype(jnp.float32), mlp_reference_f32(x1, params),
                        atol=6e-2, rtol=6e-2), "mismatch (B=8) vs f32 reference"

    # Ragged batch exercises the partial-block (masked-store) path; no
    # wrapper-side pad copy is made.
    B2 = 13
    x2 = jax.random.normal(k_x2, (B2, IN_DIM), jnp.float32)
    out2 = jax.block_until_ready(mlp_forward(x2, prepared))
    assert out2.shape == (B2, N_LABELS), out2.shape
    ref2 = mlp_reference_bf16(x2, params)
    assert jnp.allclose(out2.astype(jnp.float32), ref2, atol=2e-2, rtol=2e-2), \
        "mismatch (B=13) vs bf16 reference"

    # f32-output path (matches the PyTorch module's output dtype exactly).
    out3 = jax.block_until_ready(mlp_forward(x2, prepared, out_dtype=jnp.float32))
    assert out3.shape == (B2, N_LABELS) and out3.dtype == jnp.float32
    assert jnp.allclose(out3, ref2, atol=1e-2, rtol=1e-2), \
        "mismatch (B=13, f32 out) vs bf16 reference"

    print("KERNEL_OK")
</pallas_src>

<mosaic_0001>
module attributes {stable_mosaic.version = 11 : i64} {
  func.func @mlp_kernel(%arg0: i32, %arg1: memref<8x768xf32, #tpu.memory_space<vmem>>, %arg2: memref<768x256xbf16, #tpu.memory_space<vmem>>, %arg3: memref<1x256xf32, #tpu.memory_space<vmem>>, %arg4: memref<256x256xbf16, #tpu.memory_space<vmem>>, %arg5: memref<1x256xf32, #tpu.memory_space<vmem>>, %arg6: memref<256x256xbf16, #tpu.memory_space<vmem>>, %arg7: memref<1x256xf32, #tpu.memory_space<vmem>>, %arg8: memref<256x128xbf16, #tpu.memory_space<vmem>>, %arg9: memref<1x128xf32, #tpu.memory_space<vmem>>, %arg10: memref<8x128xbf16, #tpu.memory_space<vmem>>) attributes {dimension_semantics = [#tpu.dimension_semantics<parallel>], iteration_bounds = array<i64: 1>, scalar_prefetch = 0 : i64, scratch_operands = 0 : i64, tpu.core_type = #tpu.core_type<tc>, window_params = [{transform_indices = @transform_0, window_bounds = array<i64: 8, 768>}, {pipeline_mode = #tpu.pipeline_mode<synchronous>, transform_indices = @transform_1, window_bounds = array<i64: 768, 256>}, {pipeline_mode = #tpu.pipeline_mode<synchronous>, transform_indices = @transform_2, window_bounds = array<i64: 1, 256>}, {pipeline_mode = #tpu.pipeline_mode<synchronous>, transform_indices = @transform_3, window_bounds = array<i64: 256, 256>}, {pipeline_mode = #tpu.pipeline_mode<synchronous>, transform_indices = @transform_4, window_bounds = array<i64: 1, 256>}, {pipeline_mode = #tpu.pipeline_mode<synchronous>, transform_indices = @transform_5, window_bounds = array<i64: 256, 256>}, {pipeline_mode = #tpu.pipeline_mode<synchronous>, transform_indices = @transform_6, window_bounds = array<i64: 1, 256>}, {pipeline_mode = #tpu.pipeline_mode<synchronous>, transform_indices = @transform_7, window_bounds = array<i64: 256, 128>}, {pipeline_mode = #tpu.pipeline_mode<synchronous>, transform_indices = @transform_8, window_bounds = array<i64: 1, 128>}, {transform_indices = @transform_9, window_bounds = array<i64: 8, 128>}]} {
    %c0 = arith.constant 0 : index
    %c0_0 = arith.constant 0 : index
    %0 = vector.load %arg1[%c0, %c0_0] : memref<8x768xf32, #tpu.memory_space<vmem>>, vector<8x768xf32>
    %1 = arith.truncf %0 : vector<8x768xf32> to vector<8x768xbf16>
    %c0_1 = arith.constant 0 : index
    %c0_2 = arith.constant 0 : index
    %2 = vector.load %arg2[%c0_1, %c0_2] : memref<768x256xbf16, #tpu.memory_space<vmem>>, vector<768x256xbf16>
    %cst = arith.constant dense<0.000000e+00> : vector<8x256xf32>
    %3 = tpu.matmul %1, %2, %cst {dimension_numbers = #tpu.dot_dimension_numbers<[1], [0], [0], [1], [0, 0, 1, 1], [], []>} : vector<8x768xbf16>, vector<768x256xbf16>, vector<8x256xf32> -> vector<8x256xf32>
    %c0_3 = arith.constant 0 : index
    %c0_4 = arith.constant 0 : index
    %4 = vector.load %arg3[%c0_3, %c0_4] : memref<1x256xf32, #tpu.memory_space<vmem>>, vector<1x256xf32>
    %5 = vector.broadcast %4 : vector<1x256xf32> to vector<8x256xf32>
    %6 = arith.addf %3, %5 : vector<8x256xf32>
    %7 = arith.truncf %6 : vector<8x256xf32> to vector<8x256xbf16>
    %c0_5 = arith.constant 0 : index
    %c0_6 = arith.constant 0 : index
    %8 = vector.load %arg4[%c0_5, %c0_6] : memref<256x256xbf16, #tpu.memory_space<vmem>>, vector<256x256xbf16>
    %cst_7 = arith.constant dense<0.000000e+00> : vector<8x256xf32>
    %9 = tpu.matmul %7, %8, %cst_7 {dimension_numbers = #tpu.dot_dimension_numbers<[1], [0], [0], [1], [0, 0, 1, 1], [], []>} : vector<8x256xbf16>, vector<256x256xbf16>, vector<8x256xf32> -> vector<8x256xf32>
    %c0_8 = arith.constant 0 : index
    %c0_9 = arith.constant 0 : index
    %10 = vector.load %arg5[%c0_8, %c0_9] : memref<1x256xf32, #tpu.memory_space<vmem>>, vector<1x256xf32>
    %11 = vector.broadcast %10 : vector<1x256xf32> to vector<8x256xf32>
    %12 = arith.addf %9, %11 : vector<8x256xf32>
    %13 = arith.truncf %12 : vector<8x256xf32> to vector<8x256xbf16>
    %c0_10 = arith.constant 0 : index
    %c0_11 = arith.constant 0 : index
    %14 = vector.load %arg6[%c0_10, %c0_11] : memref<256x256xbf16, #tpu.memory_space<vmem>>, vector<256x256xbf16>
    %cst_12 = arith.constant dense<0.000000e+00> : vector<8x256xf32>
    %15 = tpu.matmul %13, %14, %cst_12 {dimension_numbers = #tpu.dot_dimension_numbers<[1], [0], [0], [1], [0, 0, 1, 1], [], []>} : vector<8x256xbf16>, vector<256x256xbf16>, vector<8x256xf32> -> vector<8x256xf32>
    %c0_13 = arith.constant 0 : index
    %c0_14 = arith.constant 0 : index
    %16 = vector.load %arg7[%c0_13, %c0_14] : memref<1x256xf32, #tpu.memory_space<vmem>>, vector<1x256xf32>
    %17 = vector.broadcast %16 : vector<1x256xf32> to vector<8x256xf32>
    %18 = arith.addf %15, %17 : vector<8x256xf32>
    %19 = arith.truncf %18 : vector<8x256xf32> to vector<8x256xbf16>
    %c0_15 = arith.constant 0 : index
    %c0_16 = arith.constant 0 : index
    %20 = vector.load %arg8[%c0_15, %c0_16] : memref<256x128xbf16, #tpu.memory_space<vmem>>, vector<256x128xbf16>
    %cst_17 = arith.constant dense<0.000000e+00> : vector<8x128xf32>
    %21 = tpu.matmul %19, %20, %cst_17 {dimension_numbers = #tpu.dot_dimension_numbers<[1], [0], [0], [1], [0, 0, 1, 1], [], []>} : vector<8x256xbf16>, vector<256x128xbf16>, vector<8x128xf32> -> vector<8x128xf32>
    %c0_18 = arith.constant 0 : index
    %c0_19 = arith.constant 0 : index
    %22 = vector.load %arg9[%c0_18, %c0_19] : memref<1x128xf32, #tpu.memory_space<vmem>>, vector<1x128xf32>
    %23 = vector.broadcast %22 : vector<1x128xf32> to vector<8x128xf32>
    %24 = arith.addf %21, %23 : vector<8x128xf32>
    %25 = arith.truncf %24 : vector<8x128xf32> to vector<8x128xbf16>
    %c0_20 = arith.constant 0 : index
    %c0_21 = arith.constant 0 : index
    %26 = vector.load %arg10[%c0_20, %c0_21] : memref<8x128xbf16, #tpu.memory_space<vmem>>, vector<8x128xbf16>
    tpu.vector_store %arg10[%c0_20, %c0_21], %25 {strides = array<i32>} : memref<8x128xbf16, #tpu.memory_space<vmem>>, vector<8x128xbf16>,
    return
  }
  func.func @transform_0(%arg0: i32) -> (i32, i32) {
    %c0_i32 = arith.constant 0 : i32
    %c0_i32_0 = arith.constant 0 : i32
    return %arg0, %c0_i32 : i32, i32
  }
  func.func @transform_1(%arg0: i32) -> (i32, i32) {
    %c0_i32 = arith.constant 0 : i32
    %c0_i32_0 = arith.constant 0 : i32
    %c0_i32_1 = arith.constant 0 : i32
    return %c0_i32, %c0_i32_0 : i32, i32
  }
  func.func @transform_2(%arg0: i32) -> (i32, i32) {
    %c0_i32 = arith.constant 0 : i32
    %c0_i32_0 = arith.constant 0 : i32
    %c0_i32_1 = arith.constant 0 : i32
    return %c0_i32, %c0_i32_0 : i32, i32
  }
  func.func @transform_3(%arg0: i32) -> (i32, i32) {
    %c0_i32 = arith.constant 0 : i32
    %c0_i32_0 = arith.constant 0 : i32
    %c0_i32_1 = arith.constant 0 : i32
    return %c0_i32, %c0_i32_0 : i32, i32
  }
  func.func @transform_4(%arg0: i32) -> (i32, i32) {
    %c0_i32 = arith.constant 0 : i32
    %c0_i32_0 = arith.constant 0 : i32
    %c0_i32_1 = arith.constant 0 : i32
    return %c0_i32, %c0_i32_0 : i32, i32
  }
  func.func @transform_5(%arg0: i32) -> (i32, i32) {
    %c0_i32 = arith.constant 0 : i32
    %c0_i32_0 = arith.constant 0 : i32
    %c0_i32_1 = arith.constant 0 : i32
    return %c0_i32, %c0_i32_0 : i32, i32
  }
  func.func @transform_6(%arg0: i32) -> (i32, i32) {
    %c0_i32 = arith.constant 0 : i32
    %c0_i32_0 = arith.constant 0 : i32
    %c0_i32_1 = arith.constant 0 : i32
    return %c0_i32, %c0_i32_0 : i32, i32
  }
  func.func @transform_7(%arg0: i32) -> (i32, i32) {
    %c0_i32 = arith.constant 0 : i32
    %c0_i32_0 = arith.constant 0 : i32
    %c0_i32_1 = arith.constant 0 : i32
    return %c0_i32, %c0_i32_0 : i32, i32
  }
  func.func @transform_8(%arg0: i32) -> (i32, i32) {
    %c0_i32 = arith.constant 0 : i32
    %c0_i32_0 = arith.constant 0 : i32
    %c0_i32_1 = arith.constant 0 : i32
    return %c0_i32, %c0_i32_0 : i32, i32
  }
  func.func @transform_9(%arg0: i32) -> (i32, i32) {
    %c0_i32 = arith.constant 0 : i32
    %c0_i32_0 = arith.constant 0 : i32
    return %arg0, %c0_i32 : i32, i32
  }
}

</mosaic_0001>

<llo_original>
// kernel: tpu_custom_call.1
$region0: #{tpu_custom_call.1}
  #allocation0 [shape = 'u32[]', space=smem, size = 0x4, offset = 0x4, fixed_abs, tag = 'smem constant byte address 0x4 - core index']
  #allocation1 [shape = 'u32[144,128]{1,0:T(1,128)}', space=vmem, size = 0x12000, scoped, tag = 'internal scratch']
  %s0 = inlined_call_operand.hbm [shape: f32[8,768], index: 0, kind: input, shape index: {}]
  %s1 = inlined_call_operand.hbm [shape: bf16[768,256], index: 1, kind: input, shape index: {}]
  %s2 = inlined_call_operand.vmem [shape: f32[1,256], index: 2, kind: input, shape index: {}]
  %s3 = inlined_call_operand.hbm [shape: bf16[256,256], index: 3, kind: input, shape index: {}]
  %s4 = inlined_call_operand.vmem [shape: f32[1,256], index: 4, kind: input, shape index: {}]
  %s5 = inlined_call_operand.hbm [shape: bf16[256,256], index: 5, kind: input, shape index: {}]
  %s6 = inlined_call_operand.vmem [shape: f32[1,256], index: 6, kind: input, shape index: {}]
  %s7 = inlined_call_operand.hbm [shape: bf16[256,128], index: 7, kind: input, shape index: {}]
  %s8 = inlined_call_operand.vmem [shape: f32[1,128], index: 8, kind: input, shape index: {}]
  %s9 = inlined_call_operand.hbm [shape: bf16[8,128], index: 9, kind: output, shape index: {}]
  %s10 = sld [smem:[#allocation0]]
  $region66: #{tpu_custom_call.1} parent=0
    _
  %s12 = ssub.s32 1, %s10
  %s13 = scalar_select 0, %s12, %s10
  $region1: #{tpu_custom_call.1} parent=0
    #allocation2 [shape = 'u8[24576]{0}', space=vmem, size = 0x6000, scoped, tag = 'input window, operand 0, single buffered']
    #allocation3 [shape = 's32[1]{0}', space=sflag, size = 0x4, scoped, tag = 'scoped memory for tpu_custom_call.1']
    #allocation4 [shape = 's32[1]{0}', space=sflag, size = 0x4, scoped, tag = 'scoped memory for tpu_custom_call.1']
    #allocation5 [shape = 'u8[393216]{0}', space=vmem, size = 0x60000, scoped, tag = 'input window, operand 1, single buffered']
    #allocation6 [shape = 's32[1]{0}', space=sflag, size = 0x4, scoped, tag = 'scoped memory for tpu_custom_call.1']
    #allocation7 [shape = 'u8[131072]{0}', space=vmem, size = 0x20000, scoped, tag = 'input window, operand 3, single buffered']
    #allocation8 [shape = 'u8[131072]{0}', space=vmem, size = 0x20000, scoped, tag = 'input window, operand 5, single buffered']
    #allocation9 [shape = 's32[1]{0}', space=sflag, size = 0x4, scoped, tag = 'scoped memory for tpu_custom_call.1']
    #allocation10 [shape = 'u8[65536]{0}', space=vmem, size = 0x10000, scoped, tag = 'input window, operand 7, single buffered']
    #allocation11 [shape = 'u8[2048]{0}', space=vmem, size = 0x800, scoped, tag = 'output window, operand 0, single buffered']
    %14 = vsyncpa [#allocation3], 0
    %15 = vsyncpa [#allocation6], 0
    %16 = vsyncpa [#allocation9], 0
    %17 = vsyncpa [#allocation4], 0
    // Predicated region
    $region2: #{tpu_custom_call.1} parent=1 // pred_check
      _
    $region3: #{tpu_custom_call.1} parent=1 // pred_check_branch
      %19 = sbr.rel (0) target = $region5
    $region4: #{tpu_custom_call.1} parent=1 // pred_region
      %s21 = ssub.s32 768, 768
      %22 = vsyncadd [#allocation3], %s21
      %s24 = sshll.u32 [#allocation2], 4
      %s25 = int_to_ptr.vmem [resolvable:$true] %s24
      %27 = dma.hbm_to_vmem [thread:$0]  %s0, 768, %s25, [#allocation3]
    $region5: #{tpu_custom_call.1} parent=1 // pred_fallthru
      _
    // Predicated region
    $region6: #{tpu_custom_call.1} parent=1 // pred_check
      _
    $region7: #{tpu_custom_call.1} parent=1 // pred_check_branch
      %29 = sbr.rel (0) target = $region9
    $region8: #{tpu_custom_call.1} parent=1 // pred_region
      %s31 = ssub.s32 12288, 12288
      %32 = vsyncadd [#allocation6], %s31
      %s33 = sshll.u32 [#allocation5], 4
      %s34 = int_to_ptr.vmem [resolvable:$true] %s33
      %39 = dma.hbm_to_vmem [thread:$0]  %s1, 12288, %s34, [#allocation6], 128, 128, 8
    $region9: #{tpu_custom_call.1} parent=1 // pred_fallthru
      _
    // Predicated region
    $region10: #{tpu_custom_call.1} parent=1 // pred_check
      _
    $region11: #{tpu_custom_call.1} parent=1 // pred_check_branch
      %41 = sbr.rel (0) target = $region13
    $region12: #{tpu_custom_call.1} parent=1 // pred_region
      _
    $region13: #{tpu_custom_call.1} parent=1 // pred_fallthru
      _
    // Predicated region
    $region14: #{tpu_custom_call.1} parent=1 // pred_check
      _
    $region15: #{tpu_custom_call.1} parent=1 // pred_check_branch
      %43 = sbr.rel (0) target = $region17
    $region16: #{tpu_custom_call.1} parent=1 // pred_region
      %s45 = ssub.s32 4096, 4096
      %46 = vsyncadd [#allocation6], %s45
      %s47 = sshll.u32 [#allocation7], 4
      %s48 = int_to_ptr.vmem [resolvable:$true] %s47
      %53 = dma.hbm_to_vmem [thread:$0]  %s3, 4096, %s48, [#allocation6], 128, 128, 8
    $region17: #{tpu_custom_call.1} parent=1 // pred_fallthru
      _
    // Predicated region
    $region18: #{tpu_custom_call.1} parent=1 // pred_check
      _
    $region19: #{tpu_custom_call.1} parent=1 // pred_check_branch
      %55 = sbr.rel (0) target = $region21
    $region20: #{tpu_custom_call.1} parent=1 // pred_region
      _
    $region21: #{tpu_custom_call.1} parent=1 // pred_fallthru
      _
    // Predicated region
    $region22: #{tpu_custom_call.1} parent=1 // pred_check
      _
    $region23: #{tpu_custom_call.1} parent=1 // pred_check_branch
      %57 = sbr.rel (0) target = $region25
    $region24: #{tpu_custom_call.1} parent=1 // pred_region
      %s59 = ssub.s32 4096, 4096
      %60 = vsyncadd [#allocation9], %s59
      %s61 = sshll.u32 [#allocation8], 4
      %s62 = int_to_ptr.vmem [resolvable:$true] %s61
      %67 = dma.hbm_to_vmem [thread:$0]  %s5, 4096, %s62, [#allocation9], 128, 128, 8
    $region25: #{tpu_custom_call.1} parent=1 // pred_fallthru
      _
    // Predicated region
    $region26: #{tpu_custom_call.1} parent=1 // pred_check
      _
    $region27: #{tpu_custom_call.1} parent=1 // pred_check_branch
      %69 = sbr.rel (0) target = $region29
    $region28: #{tpu_custom_call.1} parent=1 // pred_region
      _
    $region29: #{tpu_custom_call.1} parent=1 // pred_fallthru
      _
    // Predicated region
    $region30: #{tpu_custom_call.1} parent=1 // pred_check
      _
    $region31: #{tpu_custom_call.1} parent=1 // pred_check_branch
      %71 = sbr.rel (0) target = $region33
    $region32: #{tpu_custom_call.1} parent=1 // pred_region
      %s73 = ssub.s32 2048, 2048
      %74 = vsyncadd [#allocation9], %s73
      %s75 = sshll.u32 [#allocation10], 4
      %s76 = int_to_ptr.vmem [resolvable:$true] %s75
      %81 = dma.hbm_to_vmem [thread:$0]  %s7, 2048, %s76, [#allocation9], 64, 64, 4
    $region33: #{tpu_custom_call.1} parent=1 // pred_fallthru
      _
    // Predicated region
    $region34: #{tpu_custom_call.1} parent=1 // pred_check
      _
    $region35: #{tpu_custom_call.1} parent=1 // pred_check_branch
      %83 = sbr.rel (0) target = $region37
    $region36: #{tpu_custom_call.1} parent=1 // pred_region
      _
    $region37: #{tpu_custom_call.1} parent=1 // pred_fallthru
      _
    // Predicated region
    $region38: #{tpu_custom_call.1} parent=1 // pred_check
      _
    $region39: #{tpu_custom_call.1} parent=1 // pred_check_branch
      %85 = sbr.rel (0) target = $region41
    $region40: #{tpu_custom_call.1} parent=1 // pred_region
      %86 = dma.done [#allocation3], 768
    $region41: #{tpu_custom_call.1} parent=1 // pred_fallthru
      _
    // Predicated region
    $region42: #{tpu_custom_call.1} parent=1 // pred_check
      _
    $region43: #{tpu_custom_call.1} parent=1 // pred_check_branch
      %88 = sbr.rel (0) target = $region45
    $region44: #{tpu_custom_call.1} parent=1 // pred_region
      %89 = dma.done [#allocation6], 12288
    $region45: #{tpu_custom_call.1} parent=1 // pred_fallthru
      _
    // Predicated region
    $region46: #{tpu_custom_call.1} parent=1 // pred_check
      _
    $region47: #{tpu_custom_call.1} parent=1 // pred_check_branch
      %91 = sbr.rel (0) target = $region49
    $region48: #{tpu_custom_call.1} parent=1 // pred_region
      %92 = dma.done [#allocation6], 4096
    $region49: #{tpu_custom_call.1} parent=1 // pred_fallthru
      _
    // Predicated region
    $region50: #{tpu_custom_call.1} parent=1 // pred_check
      _
    $region51: #{tpu_custom_call.1} parent=1 // pred_check_branch
      %94 = sbr.rel (0) target = $region53
    $region52: #{tpu_custom_call.1} parent=1 // pred_region
      %95 = dma.done [#allocation9], 4096
    $region53: #{tpu_custom_call.1} parent=1 // pred_fallthru
      _
    // Predicated region
    $region54: #{tpu_custom_call.1} parent=1 // pred_check
      _
    $region55: #{tpu_custom_call.1} parent=1 // pred_check_branch
      %97 = sbr.rel (0) target = $region57
    $region56: #{tpu_custom_call.1} parent=1 // pred_region
      %98 = dma.done [#allocation9], 2048
    $region57: #{tpu_custom_call.1} parent=1 // pred_fallthru
      _
    %v100 = vld [vmem:[#allocation2] sm:$0xff]
    %v101 = vld [vmem:[#allocation2 + $0x8] sm:$0xff]
    %v102 = vld [vmem:[#allocation2 + $0x10] sm:$0xff]
    %v103 = vld [vmem:[#allocation2 + $0x18] sm:$0xff]
    %v104 = vld [vmem:[#allocation2 + $0x20] sm:$0xff]
    %v105 = vld [vmem:[#allocation2 + $0x28] sm:$0xff]
    %v106 = vpack.c.bf16 %v100, %v100
    %v107 = vpack.c.bf16 %v101, %v101
    %v108 = vpack.c.bf16 %v102, %v102
    %v109 = vpack.c.bf16 %v103, %v103
    %v110 = vpack.c.bf16 %v104, %v104
    %v111 = vpack.c.bf16 %v105, %v105
    %v112 = vld [vmem:[#allocation5] sm:$0xff]
    %v113 = vld [vmem:[#allocation5 + $0x8] sm:$0xff]
    %v114 = vld [vmem:[#allocation5 + $0x10] sm:$0xff]
    %v115 = vld [vmem:[#allocation5 + $0x18] sm:$0xff]
    %v116 = vld [vmem:[#allocation5 + $0x20] sm:$0xff]
    %v117 = vld [vmem:[#allocation5 + $0x28] sm:$0xff]
    %v118 = vld [vmem:[#allocation5 + $0x30] sm:$0xff]
    %v119 = vld [vmem:[#allocation5 + $0x38] sm:$0xff]
    %v120 = vld [vmem:[#allocation5 + $0x40] sm:$0xff]
    %v121 = vld [vmem:[#allocation5 + $0x48] sm:$0xff]
    %v122 = vld [vmem:[#allocation5 + $0x50] sm:$0xff]
    %v123 = vld [vmem:[#allocation5 + $0x58] sm:$0xff]
    %v124 = vld [vmem:[#allocation5 + $0x60] sm:$0xff]
    %v125 = vld [vmem:[#allocation5 + $0x68] sm:$0xff]
    %v126 = vld [vmem:[#allocation5 + $0x70] sm:$0xff]
    %v127 = vld [vmem:[#allocation5 + $0x78] sm:$0xff]
    %v128 = vld [vmem:[#allocation5 + $0x80] sm:$0xff]
    %v129 = vld [vmem:[#allocation5 + $0x88] sm:$0xff]
    %v130 = vld [vmem:[#allocation5 + $0x90] sm:$0xff]
    %v131 = vld [vmem:[#allocation5 + $0x98] sm:$0xff]
    %v132 = vld [vmem:[#allocation5 + $0xa0] sm:$0xff]
    %v133 = vld [vmem:[#allocation5 + $0xa8] sm:$0xff]
    %v134 = vld [vmem:[#allocation5 + $0xb0] sm:$0xff]
    %v135 = vld [vmem:[#allocation5 + $0xb8] sm:$0xff]
    %v136 = vld [vmem:[#allocation5 + $0xc0] sm:$0xff]
    %v137 = vld [vmem:[#allocation5 + $0xc8] sm:$0xff]
    %v138 = vld [vmem:[#allocation5 + $0xd0] sm:$0xff]
    %v139 = vld [vmem:[#allocation5 + $0xd8] sm:$0xff]
    %v140 = vld [vmem:[#allocation5 + $0xe0] sm:$0xff]
    %v141 = vld [vmem:[#allocation5 + $0xe8] sm:$0xff]
    %v142 = vld [vmem:[#allocation5 + $0xf0] sm:$0xff]
    %v143 = vld [vmem:[#allocation5 + $0xf8] sm:$0xff]
    %v144 = vld [vmem:[#allocation5 + $0x100] sm:$0xff]
    %v145 = vld [vmem:[#allocation5 + $0x108] sm:$0xff]
    %v146 = vld [vmem:[#allocation5 + $0x110] sm:$0xff]
    %v147 = vld [vmem:[#allocation5 + $0x118] sm:$0xff]
    %v148 = vld [vmem:[#allocation5 + $0x120] sm:$0xff]
    %v149 = vld [vmem:[#allocation5 + $0x128] sm:$0xff]
    %v150 = vld [vmem:[#allocation5 + $0x130] sm:$0xff]
    %v151 = vld [vmem:[#allocation5 + $0x138] sm:$0xff]
    %v152 = vld [vmem:[#allocation5 + $0x140] sm:$0xff]
    %v153 = vld [vmem:[#allocation5 + $0x148] sm:$0xff]
    %v154 = vld [vmem:[#allocation5 + $0x150] sm:$0xff]
    %v155 = vld [vmem:[#allocation5 + $0x158] sm:$0xff]
    %v156 = vld [vmem:[#allocation5 + $0x160] sm:$0xff]
    %v157 = vld [vmem:[#allocation5 + $0x168] sm:$0xff]
    %v158 = vld [vmem:[#allocation5 + $0x170] sm:$0xff]
    %v159 = vld [vmem:[#allocation5 + $0x178] sm:$0xff]
    %v160 = vld [vmem:[#allocation5 + $0x180] sm:$0xff]
    %v161 = vld [vmem:[#allocation5 + $0x188] sm:$0xff]
    %v162 = vld [vmem:[#allocation5 + $0x190] sm:$0xff]
    %v163 = vld [vmem:[#allocation5 + $0x198] sm:$0xff]
    %v164 = vld [vmem:[#allocation5 + $0x1a0] sm:$0xff]
    %v165 = vld [vmem:[#allocation5 + $0x1a8] sm:$0xff]
    %v166 = vld [vmem:[#allocation5 + $0x1b0] sm:$0xff]
    %v167 = vld [vmem:[#allocation5 + $0x1b8] sm:$0xff]
    %v168 = vld [vmem:[#allocation5 + $0x1c0] sm:$0xff]
    %v169 = vld [vmem:[#allocation5 + $0x1c8] sm:$0xff]
    %v170 = vld [vmem:[#allocation5 + $0x1d0] sm:$0xff]
    %v171 = vld [vmem:[#allocation5 + $0x1d8] sm:$0xff]
    %v172 = vld [vmem:[#allocation5 + $0x1e0] sm:$0xff]
    %v173 = vld [vmem:[#allocation5 + $0x1e8] sm:$0xff]
    %v174 = vld [vmem:[#allocation5 + $0x1f0] sm:$0xff]
    %v175 = vld [vmem:[#allocation5 + $0x1f8] sm:$0xff]
    %v176 = vld [vmem:[#allocation5 + $0x200] sm:$0xff]
    %v177 = vld [vmem:[#allocation5 + $0x208] sm:$0xff]
    %v178 = vld [vmem:[#allocation5 + $0x210] sm:$0xff]
    %v179 = vld [vmem:[#allocation5 + $0x218] sm:$0xff]
    %v180 = vld [vmem:[#allocation5 + $0x220] sm:$0xff]
    %v181 = vld [vmem:[#allocation5 + $0x228] sm:$0xff]
    %v182 = vld [vmem:[#allocation5 + $0x230] sm:$0xff]
    %v183 = vld [vmem:[#allocation5 + $0x238] sm:$0xff]
    %v184 = vld [vmem:[#allocation5 + $0x240] sm:$0xff]
    %v185 = vld [vmem:[#allocation5 + $0x248] sm:$0xff]
    %v186 = vld [vmem:[#allocation5 + $0x250] sm:$0xff]
    %v187 = vld [vmem:[#allocation5 + $0x258] sm:$0xff]
    %v188 = vld [vmem:[#allocation5 + $0x260] sm:$0xff]
    %v189 = vld [vmem:[#allocation5 + $0x268] sm:$0xff]
    %v190 = vld [vmem:[#allocation5 + $0x270] sm:$0xff]
    %v191 = vld [vmem:[#allocation5 + $0x278] sm:$0xff]
    %v192 = vld [vmem:[#allocation5 + $0x280] sm:$0xff]
    %v193 = vld [vmem:[#allocation5 + $0x288] sm:$0xff]
    %v194 = vld [vmem:[#allocation5 + $0x290] sm:$0xff]
    %v195 = vld [vmem:[#allocation5 + $0x298] sm:$0xff]
    %v196 = vld [vmem:[#allocation5 + $0x2a0] sm:$0xff]
    %v197 = vld [vmem:[#allocation5 + $0x2a8] sm:$0xff]
    %v198 = vld [vmem:[#allocation5 + $0x2b0] sm:$0xff]
    %v199 = vld [vmem:[#allocation5 + $0x2b8] sm:$0xff]
    %v200 = vld [vmem:[#allocation5 + $0x2c0] sm:$0xff]
    %v201 = vld [vmem:[#allocation5 + $0x2c8] sm:$0xff]
    %v202 = vld [vmem:[#allocation5 + $0x2d0] sm:$0xff]
    %v203 = vld [vmem:[#allocation5 + $0x2d8] sm:$0xff]
    %v204 = vld [vmem:[#allocation5 + $0x2e0] sm:$0xff]
    %v205 = vld [vmem:[#allocation5 + $0x2e8] sm:$0xff]
    %v206 = vld [vmem:[#allocation5 + $0x2f0] sm:$0xff]
    %v207 = vld [vmem:[#allocation5 + $0x2f8] sm:$0xff]
    %v208 = vld [vmem:[%s2] sm:$0x3]
    %v210 = vlaneseq
    %v211 = vshrl.u32 %v210, 7
    %v212 = vsub.s32 0, %v211
    %v213 = vrot.slane %v208, %v212
    %v214 = vlaneseq
    %v215 = vshrl.u32 %v214, 7
    %v216 = vsub.s32 1, %v215
    %v217 = vrot.slane %v208, %v216
    %v316 = vunpack.c.l.b16 %v112
    %v317 = vunpack.c.h.b16 %v112
    %v318 = vunpack.c.l.b16 %v113
    %v319 = vunpack.c.h.b16 %v113
    %v320 = vunpack.c.l.b16 %v114
    %v321 = vunpack.c.h.b16 %v114
    %v322 = vunpack.c.l.b16 %v115
    %v323 = vunpack.c.h.b16 %v115
    %v324 = vunpack.c.l.b16 %v116
    %v325 = vunpack.c.h.b16 %v116
    %v326 = vunpack.c.l.b16 %v117
    %v327 = vunpack.c.h.b16 %v117
    %v328 = vunpack.c.l.b16 %v118
    %v329 = vunpack.c.h.b16 %v118
    %v330 = vunpack.c.l.b16 %v119
    %v331 = vunpack.c.h.b16 %v119
    %v332 = vunpack.c.l.b16 %v120
    %v333 = vunpack.c.h.b16 %v120
    %v334 = vunpack.c.l.b16 %v121
    %v335 = vunpack.c.h.b16 %v121
    %v336 = vunpack.c.l.b16 %v122
    %v337 = vunpack.c.h.b16 %v122
    %v338 = vunpack.c.l.b16 %v123
    %v339 = vunpack.c.h.b16 %v123
    %v340 = vunpack.c.l.b16 %v124
    %v341 = vunpack.c.h.b16 %v124
    %v342 = vunpack.c.l.b16 %v125
    %v343 = vunpack.c.h.b16 %v125
    %v344 = vunpack.c.l.b16 %v126
    %v345 = vunpack.c.h.b16 %v126
    %v346 = vunpack.c.l.b16 %v127
    %v347 = vunpack.c.h.b16 %v127
    %v348 = vunpack.c.l.b16 %v128
    %v349 = vunpack.c.h.b16 %v128
    %v350 = vunpack.c.l.b16 %v129
    %v351 = vunpack.c.h.b16 %v129
    %v352 = vunpack.c.l.b16 %v130
    %v353 = vunpack.c.h.b16 %v130
    %v354 = vunpack.c.l.b16 %v131
    %v355 = vunpack.c.h.b16 %v131
    %v356 = vunpack.c.l.b16 %v132
    %v357 = vunpack.c.h.b16 %v132
    %v358 = vunpack.c.l.b16 %v133
    %v359 = vunpack.c.h.b16 %v133
    %v360 = vunpack.c.l.b16 %v134
    %v361 = vunpack.c.h.b16 %v134
    %v362 = vunpack.c.l.b16 %v135
    %v363 = vunpack.c.h.b16 %v135
    %v364 = vunpack.c.l.b16 %v136
    %v365 = vunpack.c.h.b16 %v136
    %v366 = vunpack.c.l.b16 %v137
    %v367 = vunpack.c.h.b16 %v137
    %v368 = vunpack.c.l.b16 %v138
    %v369 = vunpack.c.h.b16 %v138
    %v370 = vunpack.c.l.b16 %v139
    %v371 = vunpack.c.h.b16 %v139
    %v372 = vunpack.c.l.b16 %v140
    %v373 = vunpack.c.h.b16 %v140
    %v374 = vunpack.c.l.b16 %v141
    %v375 = vunpack.c.h.b16 %v141
    %v376 = vunpack.c.l.b16 %v142
    %v377 = vunpack.c.h.b16 %v142
    %v378 = vunpack.c.l.b16 %v143
    %v379 = vunpack.c.h.b16 %v143
    %v380 = vunpack.c.l.b16 %v144
    %v381 = vunpack.c.h.b16 %v144
    %v382 = vunpack.c.l.b16 %v145
    %v383 = vunpack.c.h.b16 %v145
    %v384 = vunpack.c.l.b16 %v146
    %v385 = vunpack.c.h.b16 %v146
    %v386 = vunpack.c.l.b16 %v147
    %v387 = vunpack.c.h.b16 %v147
    %v388 = vunpack.c.l.b16 %v148
    %v389 = vunpack.c.h.b16 %v148
    %v390 = vunpack.c.l.b16 %v149
    %v391 = vunpack.c.h.b16 %v149
    %v392 = vunpack.c.l.b16 %v150
    %v393 = vunpack.c.h.b16 %v150
    %v394 = vunpack.c.l.b16 %v151
    %v395 = vunpack.c.h.b16 %v151
    %v396 = vunpack.c.l.b16 %v152
    %v397 = vunpack.c.h.b16 %v152
    %v398 = vunpack.c.l.b16 %v153
    %v399 = vunpack.c.h.b16 %v153
    %v400 = vunpack.c.l.b16 %v154
    %v401 = vunpack.c.h.b16 %v154
    %v402 = vunpack.c.l.b16 %v155
    %v403 = vunpack.c.h.b16 %v155
    %v404 = vunpack.c.l.b16 %v156
    %v405 = vunpack.c.h.b16 %v156
    %v406 = vunpack.c.l.b16 %v157
    %v407 = vunpack.c.h.b16 %v157
    %v408 = vunpack.c.l.b16 %v158
    %v409 = vunpack.c.h.b16 %v158
    %v410 = vunpack.c.l.b16 %v159
    %v411 = vunpack.c.h.b16 %v159
    %v412 = vunpack.c.l.b16 %v160
    %v413 = vunpack.c.h.b16 %v160
    %v414 = vunpack.c.l.b16 %v161
    %v415 = vunpack.c.h.b16 %v161
    %v416 = vunpack.c.l.b16 %v162
    %v417 = vunpack.c.h.b16 %v162
    %v418 = vunpack.c.l.b16 %v163
    %v419 = vunpack.c.h.b16 %v163
    %v420 = vunpack.c.l.b16 %v164
    %v421 = vunpack.c.h.b16 %v164
    %v422 = vunpack.c.l.b16 %v165
    %v423 = vunpack.c.h.b16 %v165
    %v424 = vunpack.c.l.b16 %v166
    %v425 = vunpack.c.h.b16 %v166
    %v426 = vunpack.c.l.b16 %v167
    %v427 = vunpack.c.h.b16 %v167
    %v428 = vunpack.c.l.b16 %v168
    %v429 = vunpack.c.h.b16 %v168
    %v430 = vunpack.c.l.b16 %v169
    %v431 = vunpack.c.h.b16 %v169
    %v432 = vunpack.c.l.b16 %v170
    %v433 = vunpack.c.h.b16 %v170
    %v434 = vunpack.c.l.b16 %v171
    %v435 = vunpack.c.h.b16 %v171
    %v436 = vunpack.c.l.b16 %v172
    %v437 = vunpack.c.h.b16 %v172
    %v438 = vunpack.c.l.b16 %v173
    %v439 = vunpack.c.h.b16 %v173
    %v440 = vunpack.c.l.b16 %v174
    %v441 = vunpack.c.h.b16 %v174
    %v442 = vunpack.c.l.b16 %v175
    %v443 = vunpack.c.h.b16 %v175
    %v444 = vunpack.c.l.b16 %v176
    %v445 = vunpack.c.h.b16 %v176
    %v446 = vunpack.c.l.b16 %v177
    %v447 = vunpack.c.h.b16 %v177
    %v448 = vunpack.c.l.b16 %v178
    %v449 = vunpack.c.h.b16 %v178
    %v450 = vunpack.c.l.b16 %v179
    %v451 = vunpack.c.h.b16 %v179
    %v452 = vunpack.c.l.b16 %v180
    %v453 = vunpack.c.h.b16 %v180
    %v454 = vunpack.c.l.b16 %v181
    %v455 = vunpack.c.h.b16 %v181
    %v456 = vunpack.c.l.b16 %v182
    %v457 = vunpack.c.h.b16 %v182
    %v458 = vunpack.c.l.b16 %v183
    %v459 = vunpack.c.h.b16 %v183
    %v460 = vunpack.c.l.b16 %v184
    %v461 = vunpack.c.h.b16 %v184
    %v462 = vunpack.c.l.b16 %v185
    %v463 = vunpack.c.h.b16 %v185
    %v464 = vunpack.c.l.b16 %v186
    %v465 = vunpack.c.h.b16 %v186
    %v466 = vunpack.c.l.b16 %v187
    %v467 = vunpack.c.h.b16 %v187
    %v468 = vunpack.c.l.b16 %v188
    %v469 = vunpack.c.h.b16 %v188
    %v470 = vunpack.c.l.b16 %v189
    %v471 = vunpack.c.h.b16 %v189
    %v472 = vunpack.c.l.b16 %v190
    %v473 = vunpack.c.h.b16 %v190
    %v474 = vunpack.c.l.b16 %v191
    %v475 = vunpack.c.h.b16 %v191
    %v476 = vunpack.c.l.b16 %v192
    %v477 = vunpack.c.h.b16 %v192
    %v478 = vunpack.c.l.b16 %v193
    %v479 = vunpack.c.h.b16 %v193
    %v480 = vunpack.c.l.b16 %v194
    %v481 = vunpack.c.h.b16 %v194
    %v482 = vunpack.c.l.b16 %v195
    %v483 = vunpack.c.h.b16 %v195
    %v484 = vunpack.c.l.b16 %v196
    %v485 = vunpack.c.h.b16 %v196
    %v486 = vunpack.c.l.b16 %v197
    %v487 = vunpack.c.h.b16 %v197
    %v488 = vunpack.c.l.b16 %v198
    %v489 = vunpack.c.h.b16 %v198
    %v490 = vunpack.c.l.b16 %v199
    %v491 = vunpack.c.h.b16 %v199
    %v492 = vunpack.c.l.b16 %v200
    %v493 = vunpack.c.h.b16 %v200
    %v494 = vunpack.c.l.b16 %v201
    %v495 = vunpack.c.h.b16 %v201
    %v496 = vunpack.c.l.b16 %v202
    %v497 = vunpack.c.h.b16 %v202
    %v498 = vunpack.c.l.b16 %v203
    %v499 = vunpack.c.h.b16 %v203
    %v500 = vunpack.c.l.b16 %v204
    %v501 = vunpack.c.h.b16 %v204
    %v502 = vunpack.c.l.b16 %v205
    %v503 = vunpack.c.h.b16 %v205
    %v504 = vunpack.c.l.b16 %v206
    %v505 = vunpack.c.h.b16 %v206
    %v506 = vunpack.c.l.b16 %v207
    %v507 = vunpack.c.h.b16 %v207
    %v508 = vpack.c.b16 %v318, %v316
    %v509 = vpack.c.b16 %v319, %v317
    %v510 = vpack.c.b16 %v322, %v320
    %v511 = vpack.c.b16 %v323, %v321
    %v512 = vpack.c.b16 %v326, %v324
    %v513 = vpack.c.b16 %v327, %v325
    %v514 = vpack.c.b16 %v330, %v328
    %v515 = vpack.c.b16 %v331, %v329
    %v516 = vpack.c.b16 %v334, %v332
    %v517 = vpack.c.b16 %v335, %v333
    %v518 = vpack.c.b16 %v338, %v336
    %v519 = vpack.c.b16 %v339, %v337
    %v520 = vpack.c.b16 %v342, %v340
    %v521 = vpack.c.b16 %v343, %v341
    %v522 = vpack.c.b16 %v346, %v344
    %v523 = vpack.c.b16 %v347, %v345
    %v524 = vpack.c.b16 %v350, %v348
    %v525 = vpack.c.b16 %v351, %v349
    %v526 = vpack.c.b16 %v354, %v352
    %v527 = vpack.c.b16 %v355, %v353
    %v528 = vpack.c.b16 %v358, %v356
    %v529 = vpack.c.b16 %v359, %v357
    %v530 = vpack.c.b16 %v362, %v360
    %v531 = vpack.c.b16 %v363, %v361
    %v532 = vpack.c.b16 %v366, %v364
    %v533 = vpack.c.b16 %v367, %v365
    %v534 = vpack.c.b16 %v370, %v368
    %v535 = vpack.c.b16 %v371, %v369
    %v536 = vpack.c.b16 %v374, %v372
    %v537 = vpack.c.b16 %v375, %v373
    %v538 = vpack.c.b16 %v378, %v376
    %v539 = vpack.c.b16 %v379, %v377
    %v540 = vpack.c.b16 %v382, %v380
    %v541 = vpack.c.b16 %v383, %v381
    %v542 = vpack.c.b16 %v386, %v384
    %v543 = vpack.c.b16 %v387, %v385
    %v544 = vpack.c.b16 %v390, %v388
    %v545 = vpack.c.b16 %v391, %v389
    %v546 = vpack.c.b16 %v394, %v392
    %v547 = vpack.c.b16 %v395, %v393
    %v548 = vpack.c.b16 %v398, %v396
    %v549 = vpack.c.b16 %v399, %v397
    %v550 = vpack.c.b16 %v402, %v400
    %v551 = vpack.c.b16 %v403, %v401
    %v552 = vpack.c.b16 %v406, %v404
    %v553 = vpack.c.b16 %v407, %v405
    %v554 = vpack.c.b16 %v410, %v408
    %v555 = vpack.c.b16 %v411, %v409
    %v556 = vpack.c.b16 %v414, %v412
    %v557 = vpack.c.b16 %v415, %v413
    %v558 = vpack.c.b16 %v418, %v416
    %v559 = vpack.c.b16 %v419, %v417
    %v560 = vpack.c.b16 %v422, %v420
    %v561 = vpack.c.b16 %v423, %v421
    %v562 = vpack.c.b16 %v426, %v424
    %v563 = vpack.c.b16 %v427, %v425
    %v564 = vpack.c.b16 %v430, %v428
    %v565 = vpack.c.b16 %v431, %v429
    %v566 = vpack.c.b16 %v434, %v432
    %v567 = vpack.c.b16 %v435, %v433
    %v568 = vpack.c.b16 %v438, %v436
    %v569 = vpack.c.b16 %v439, %v437
    %v570 = vpack.c.b16 %v442, %v440
    %v571 = vpack.c.b16 %v443, %v441
    %v572 = vpack.c.b16 %v446, %v444
    %v573 = vpack.c.b16 %v447, %v445
    %v574 = vpack.c.b16 %v450, %v448
    %v575 = vpack.c.b16 %v451, %v449
    %v576 = vpack.c.b16 %v454, %v452
    %v577 = vpack.c.b16 %v455, %v453
    %v578 = vpack.c.b16 %v458, %v456
    %v579 = vpack.c.b16 %v459, %v457
    %v580 = vpack.c.b16 %v462, %v460
    %v581 = vpack.c.b16 %v463, %v461
    %v582 = vpack.c.b16 %v466, %v464
    %v583 = vpack.c.b16 %v467, %v465
    %v584 = vpack.c.b16 %v470, %v468
    %v585 = vpack.c.b16 %v471, %v469
    %v586 = vpack.c.b16 %v474, %v472
    %v587 = vpack.c.b16 %v475, %v473
    %v588 = vpack.c.b16 %v478, %v476
    %v589 = vpack.c.b16 %v479, %v477
    %v590 = vpack.c.b16 %v482, %v480
    %v591 = vpack.c.b16 %v483, %v481
    %v592 = vpack.c.b16 %v486, %v484
    %v593 = vpack.c.b16 %v487, %v485
    %v594 = vpack.c.b16 %v490, %v488
    %v595 = vpack.c.b16 %v491, %v489
    %v596 = vpack.c.b16 %v494, %v492
    %v597 = vpack.c.b16 %v495, %v493
    %v598 = vpack.c.b16 %v498, %v496
    %v599 = vpack.c.b16 %v499, %v497
    %v600 = vpack.c.b16 %v502, %v500
    %v601 = vpack.c.b16 %v503, %v501
    %v602 = vpack.c.b16 %v506, %v504
    %v603 = vpack.c.b16 %v507, %v505
    %700 = vmatprep.subr.bf16.mxu0 %v509
    %701 = vmatpush1.bf16.msra.mxu0 %v508
    %702 = vmatprep.subr.bf16.mxu0 %v511
    %703 = vmatpush1.bf16.msra.mxu0 %v510
    %704 = vmatprep.subr.bf16.mxu0 %v513
    %705 = vmatpush1.bf16.msra.mxu0 %v512
    %706 = vmatprep.subr.bf16.mxu0 %v515
    %707 = vmatpush1.bf16.msra.mxu0 %v514
    %708 = vmatprep.subr.bf16.mxu0 %v517
    %709 = vmatpush1.bf16.msra.mxu0 %v516
    %710 = vmatprep.subr.bf16.mxu0 %v519
    %711 = vmatpush1.bf16.msra.mxu0 %v518
    %712 = vmatprep.subr.bf16.mxu0 %v521
    %713 = vmatpush1.bf16.msra.mxu0 %v520
    %714 = vmatprep.subr.bf16.mxu0 %v523
    %715 = vmatpush1.bf16.msra.mxu0 %v522
    %716 = vmatprep.subr.bf16.mxu0 %v525
    %717 = vmatpush1.bf16.msra.mxu0 %v524
    %718 = vmatprep.subr.bf16.mxu0 %v527
    %719 = vmatpush1.bf16.msra.mxu0 %v526
    %720 = vmatprep.subr.bf16.mxu0 %v529
    %721 = vmatpush1.bf16.msra.mxu0 %v528
    %722 = vmatprep.subr.bf16.mxu0 %v531
    %723 = vmatpush1.bf16.msra.mxu0 %v530
    %724 = vmatprep.subr.bf16.mxu0 %v533
    %725 = vmatpush1.bf16.msra.mxu0 %v532
    %726 = vmatprep.subr.bf16.mxu0 %v535
    %727 = vmatpush1.bf16.msra.mxu0 %v534
    %728 = vmatprep.subr.bf16.mxu0 %v537
    %729 = vmatpush1.bf16.msra.mxu0 %v536
    %730 = vmatprep.subr.bf16.mxu0 %v539
    %731 = vmatpush1.bf16.msra.mxu0 %v538
    %732 = vmatprep.mubr.bf16.mxu0 %v107
    %733 = vmatmul.mubr.bf16.gmra.mrb[0].mxu0 %v106
    %v734 = vpop.f32.mrb[0].mxu0
    %v735 = vadd.f32 %v213, %v734
    %v736 = vpop.f32.mrb[0].mxu0
    %v737 = vadd.f32 %v217, %v736
    %v738 = vpop.f32.mrb[0].mxu0
    %v739 = vpop.f32.mrb[0].mxu0
    %740 = vdwg.mxu0
    %741 = vmatprep.subr.bf16.mxu0 %v541
    %742 = vmatpush1.bf16.msra.mxu0 %v540
    %743 = vmatprep.subr.bf16.mxu0 %v543
    %744 = vmatpush1.bf16.msra.mxu0 %v542
    %745 = vmatprep.subr.bf16.mxu0 %v545
    %746 = vmatpush1.bf16.msra.mxu0 %v544
    %747 = vmatprep.subr.bf16.mxu0 %v547
    %748 = vmatpush1.bf16.msra.mxu0 %v546
    %749 = vmatprep.subr.bf16.mxu0 %v549
    %750 = vmatpush1.bf16.msra.mxu0 %v548
    %751 = vmatprep.subr.bf16.mxu0 %v551
    %752 = vmatpush1.bf16.msra.mxu0 %v550
    %753 = vmatprep.subr.bf16.mxu0 %v553
    %754 = vmatpush1.bf16.msra.mxu0 %v552
    %755 = vmatprep.subr.bf16.mxu0 %v555
    %756 = vmatpush1.bf16.msra.mxu0 %v554
    %757 = vmatprep.subr.bf16.mxu0 %v557
    %758 = vmatpush1.bf16.msra.mxu0 %v556
    %759 = vmatprep.subr.bf16.mxu0 %v559
    %760 = vmatpush1.bf16.msra.mxu0 %v558
    %761 = vmatprep.subr.bf16.mxu0 %v561
    %762 = vmatpush1.bf16.msra.mxu0 %v560
    %763 = vmatprep.subr.bf16.mxu0 %v563
    %764 = vmatpush1.bf16.msra.mxu0 %v562
    %765 = vmatprep.subr.bf16.mxu0 %v565
    %766 = vmatpush1.bf16.msra.mxu0 %v564
    %767 = vmatprep.subr.bf16.mxu0 %v567
    %768 = vmatpush1.bf16.msra.mxu0 %v566
    %769 = vmatprep.subr.bf16.mxu0 %v569
    %770 = vmatpush1.bf16.msra.mxu0 %v568
    %771 = vmatprep.subr.bf16.mxu0 %v571
    %772 = vmatpush1.bf16.msra.mxu0 %v570
    %773 = vmatprep.mubr.bf16.mxu0 %v109
    %774 = vmatmul.mubr.bf16.gmra.mrb[0].mxu0 %v108
    %v775 = vpop.f32.mrb[0].mxu0
    %v776 = vadd.f32 %v735, %v775
    %v777 = vpop.f32.mrb[0].mxu0
    %v778 = vadd.f32 %v737, %v777
    %v779 = vpop.f32.mrb[0].mxu0
    %v780 = vpop.f32.mrb[0].mxu0
    %781 = vdwg.mxu0
    %782 = vmatprep.subr.bf16.mxu0 %v573
    %783 = vmatpush1.bf16.msra.mxu0 %v572
    %784 = vmatprep.subr.bf16.mxu0 %v575
    %785 = vmatpush1.bf16.msra.mxu0 %v574
    %786 = vmatprep.subr.bf16.mxu0 %v577
    %787 = vmatpush1.bf16.msra.mxu0 %v576
    %788 = vmatprep.subr.bf16.mxu0 %v579
    %789 = vmatpush1.bf16.msra.mxu0 %v578
    %790 = vmatprep.subr.bf16.mxu0 %v581
    %791 = vmatpush1.bf16.msra.mxu0 %v580
    %792 = vmatprep.subr.bf16.mxu0 %v583
    %793 = vmatpush1.bf16.msra.mxu0 %v582
    %794 = vmatprep.subr.bf16.mxu0 %v585
    %795 = vmatpush1.bf16.msra.mxu0 %v584
    %796 = vmatprep.subr.bf16.mxu0 %v587
    %797 = vmatpush1.bf16.msra.mxu0 %v586
    %798 = vmatprep.subr.bf16.mxu0 %v589
    %799 = vmatpush1.bf16.msra.mxu0 %v588
    %800 = vmatprep.subr.bf16.mxu0 %v591
    %801 = vmatpush1.bf16.msra.mxu0 %v590
    %802 = vmatprep.subr.bf16.mxu0 %v593
    %803 = vmatpush1.bf16.msra.mxu0 %v592
    %804 = vmatprep.subr.bf16.mxu0 %v595
    %805 = vmatpush1.bf16.msra.mxu0 %v594
    %806 = vmatprep.subr.bf16.mxu0 %v597
    %807 = vmatpush1.bf16.msra.mxu0 %v596
    %808 = vmatprep.subr.bf16.mxu0 %v599
    %809 = vmatpush1.bf16.msra.mxu0 %v598
    %810 = vmatprep.subr.bf16.mxu0 %v601
    %811 = vmatpush1.bf16.msra.mxu0 %v600
    %812 = vmatprep.subr.bf16.mxu0 %v603
    %813 = vmatpush1.bf16.msra.mxu0 %v602
    %814 = vmatprep.mubr.bf16.mxu0 %v111
    %815 = vmatmul.mubr.bf16.gmra.mrb[0].mxu0 %v110
    %v816 = vpop.f32.mrb[0].mxu0
    %v817 = vadd.f32 %v776, %v816
    %v818 = vpop.f32.mrb[0].mxu0
    %v819 = vadd.f32 %v778, %v818
    %v820 = vpop.f32.mrb[0].mxu0
    %v821 = vpop.f32.mrb[0].mxu0
    %822 = vdwg.mxu0
    %v823 = vpack.c.bf16 %v817, %v817
    %v824 = vpack.c.bf16 %v819, %v819
    %v825 = vld [vmem:[#allocation7] sm:$0xff]
    %v826 = vld [vmem:[#allocation7 + $0x8] sm:$0xff]
    %v827 = vld [vmem:[#allocation7 + $0x10] sm:$0xff]
    %v828 = vld [vmem:[#allocation7 + $0x18] sm:$0xff]
    %v829 = vld [vmem:[#allocation7 + $0x20] sm:$0xff]
    %v830 = vld [vmem:[#allocation7 + $0x28] sm:$0xff]
    %v831 = vld [vmem:[#allocation7 + $0x30] sm:$0xff]
    %v832 = vld [vmem:[#allocation7 + $0x38] sm:$0xff]
    %v833 = vld [vmem:[#allocation7 + $0x40] sm:$0xff]
    %v834 = vld [vmem:[#allocation7 + $0x48] sm:$0xff]
    %v835 = vld [vmem:[#allocation7 + $0x50] sm:$0xff]
    %v836 = vld [vmem:[#allocation7 + $0x58] sm:$0xff]
    %v837 = vld [vmem:[#allocation7 + $0x60] sm:$0xff]
    %v838 = vld [vmem:[#allocation7 + $0x68] sm:$0xff]
    %v839 = vld [vmem:[#allocation7 + $0x70] sm:$0xff]
    %v840 = vld [vmem:[#allocation7 + $0x78] sm:$0xff]
    %v841 = vld [vmem:[#allocation7 + $0x80] sm:$0xff]
    %v842 = vld [vmem:[#allocation7 + $0x88] sm:$0xff]
    %v843 = vld [vmem:[#allocation7 + $0x90] sm:$0xff]
    %v844 = vld [vmem:[#allocation7 + $0x98] sm:$0xff]
    %v845 = vld [vmem:[#allocation7 + $0xa0] sm:$0xff]
    %v846 = vld [vmem:[#allocation7 + $0xa8] sm:$0xff]
    %v847 = vld [vmem:[#allocation7 + $0xb0] sm:$0xff]
    %v848 = vld [vmem:[#allocation7 + $0xb8] sm:$0xff]
    %v849 = vld [vmem:[#allocation7 + $0xc0] sm:$0xff]
    %v850 = vld [vmem:[#allocation7 + $0xc8] sm:$0xff]
    %v851 = vld [vmem:[#allocation7 + $0xd0] sm:$0xff]
    %v852 = vld [vmem:[#allocation7 + $0xd8] sm:$0xff]
    %v853 = vld [vmem:[#allocation7 + $0xe0] sm:$0xff]
    %v854 = vld [vmem:[#allocation7 + $0xe8] sm:$0xff]
    %v855 = vld [vmem:[#allocation7 + $0xf0] sm:$0xff]
    %v856 = vld [vmem:[#allocation7 + $0xf8] sm:$0xff]
    %v857 = vld [vmem:[%s4] sm:$0x3]
    %v859 = vlaneseq
    %v860 = vshrl.u32 %v859, 7
    %v861 = vsub.s32 0, %v860
    %v862 = vrot.slane %v857, %v861
    %v863 = vlaneseq
    %v864 = vshrl.u32 %v863, 7
    %v865 = vsub.s32 1, %v864
    %v866 = vrot.slane %v857, %v865
    %v901 = vunpack.c.l.b16 %v825
    %v902 = vunpack.c.h.b16 %v825
    %v903 = vunpack.c.l.b16 %v826
    %v904 = vunpack.c.h.b16 %v826
    %v905 = vunpack.c.l.b16 %v827
    %v906 = vunpack.c.h.b16 %v827
    %v907 = vunpack.c.l.b16 %v828
    %v908 = vunpack.c.h.b16 %v828
    %v909 = vunpack.c.l.b16 %v829
    %v910 = vunpack.c.h.b16 %v829
    %v911 = vunpack.c.l.b16 %v830
    %v912 = vunpack.c.h.b16 %v830
    %v913 = vunpack.c.l.b16 %v831
    %v914 = vunpack.c.h.b16 %v831
    %v915 = vunpack.c.l.b16 %v832
    %v916 = vunpack.c.h.b16 %v832
    %v917 = vunpack.c.l.b16 %v833
    %v918 = vunpack.c.h.b16 %v833
    %v919 = vunpack.c.l.b16 %v834
    %v920 = vunpack.c.h.b16 %v834
    %v921 = vunpack.c.l.b16 %v835
    %v922 = vunpack.c.h.b16 %v835
    %v923 = vunpack.c.l.b16 %v836
    %v924 = vunpack.c.h.b16 %v836
    %v925 = vunpack.c.l.b16 %v837
    %v926 = vunpack.c.h.b16 %v837
    %v927 = vunpack.c.l.b16 %v838
    %v928 = vunpack.c.h.b16 %v838
    %v929 = vunpack.c.l.b16 %v839
    %v930 = vunpack.c.h.b16 %v839
    %v931 = vunpack.c.l.b16 %v840
    %v932 = vunpack.c.h.b16 %v840
    %v933 = vunpack.c.l.b16 %v841
    %v934 = vunpack.c.h.b16 %v841
    %v935 = vunpack.c.l.b16 %v842
    %v936 = vunpack.c.h.b16 %v842
    %v937 = vunpack.c.l.b16 %v843
    %v938 = vunpack.c.h.b16 %v843
    %v939 = vunpack.c.l.b16 %v844
    %v940 = vunpack.c.h.b16 %v844
    %v941 = vunpack.c.l.b16 %v845
    %v942 = vunpack.c.h.b16 %v845
    %v943 = vunpack.c.l.b16 %v846
    %v944 = vunpack.c.h.b16 %v846
    %v945 = vunpack.c.l.b16 %v847
    %v946 = vunpack.c.h.b16 %v847
    %v947 = vunpack.c.l.b16 %v848
    %v948 = vunpack.c.h.b16 %v848
    %v949 = vunpack.c.l.b16 %v849
    %v950 = vunpack.c.h.b16 %v849
    %v951 = vunpack.c.l.b16 %v850
    %v952 = vunpack.c.h.b16 %v850
    %v953 = vunpack.c.l.b16 %v851
    %v954 = vunpack.c.h.b16 %v851
    %v955 = vunpack.c.l.b16 %v852
    %v956 = vunpack.c.h.b16 %v852
    %v957 = vunpack.c.l.b16 %v853
    %v958 = vunpack.c.h.b16 %v853
    %v959 = vunpack.c.l.b16 %v854
    %v960 = vunpack.c.h.b16 %v854
    %v961 = vunpack.c.l.b16 %v855
    %v962 = vunpack.c.h.b16 %v855
    %v963 = vunpack.c.l.b16 %v856
    %v964 = vunpack.c.h.b16 %v856
    %v965 = vpack.c.b16 %v903, %v901
    %v966 = vpack.c.b16 %v904, %v902
    %v967 = vpack.c.b16 %v907, %v905
    %v968 = vpack.c.b16 %v908, %v906
    %v969 = vpack.c.b16 %v911, %v909
    %v970 = vpack.c.b16 %v912, %v910
    %v971 = vpack.c.b16 %v915, %v913
    %v972 = vpack.c.b16 %v916, %v914
    %v973 = vpack.c.b16 %v919, %v917
    %v974 = vpack.c.b16 %v920, %v918
    %v975 = vpack.c.b16 %v923, %v921
    %v976 = vpack.c.b16 %v924, %v922
    %v977 = vpack.c.b16 %v927, %v925
    %v978 = vpack.c.b16 %v928, %v926
    %v979 = vpack.c.b16 %v931, %v929
    %v980 = vpack.c.b16 %v932, %v930
    %v981 = vpack.c.b16 %v935, %v933
    %v982 = vpack.c.b16 %v936, %v934
    %v983 = vpack.c.b16 %v939, %v937
    %v984 = vpack.c.b16 %v940, %v938
    %v985 = vpack.c.b16 %v943, %v941
    %v986 = vpack.c.b16 %v944, %v942
    %v987 = vpack.c.b16 %v947, %v945
    %v988 = vpack.c.b16 %v948, %v946
    %v989 = vpack.c.b16 %v951, %v949
    %v990 = vpack.c.b16 %v952, %v950
    %v991 = vpack.c.b16 %v955, %v953
    %v992 = vpack.c.b16 %v956, %v954
    %v993 = vpack.c.b16 %v959, %v957
    %v994 = vpack.c.b16 %v960, %v958
    %v995 = vpack.c.b16 %v963, %v961
    %v996 = vpack.c.b16 %v964, %v962
    %1029 = vmatprep.subr.bf16.mxu0 %v966
    %1030 = vmatpush1.bf16.msra.mxu0 %v965
    %1031 = vmatprep.subr.bf16.mxu0 %v968
    %1032 = vmatpush1.bf16.msra.mxu0 %v967
    %1033 = vmatprep.subr.bf16.mxu0 %v970
    %1034 = vmatpush1.bf16.msra.mxu0 %v969
    %1035 = vmatprep.subr.bf16.mxu0 %v972
    %1036 = vmatpush1.bf16.msra.mxu0 %v971
    %1037 = vmatprep.subr.bf16.mxu0 %v974
    %1038 = vmatpush1.bf16.msra.mxu0 %v973
    %1039 = vmatprep.subr.bf16.mxu0 %v976
    %1040 = vmatpush1.bf16.msra.mxu0 %v975
    %1041 = vmatprep.subr.bf16.mxu0 %v978
    %1042 = vmatpush1.bf16.msra.mxu0 %v977
    %1043 = vmatprep.subr.bf16.mxu0 %v980
    %1044 = vmatpush1.bf16.msra.mxu0 %v979
    %1045 = vmatprep.subr.bf16.mxu0 %v982
    %1046 = vmatpush1.bf16.msra.mxu0 %v981
    %1047 = vmatprep.subr.bf16.mxu0 %v984
    %1048 = vmatpush1.bf16.msra.mxu0 %v983
    %1049 = vmatprep.subr.bf16.mxu0 %v986
    %1050 = vmatpush1.bf16.msra.mxu0 %v985
    %1051 = vmatprep.subr.bf16.mxu0 %v988
    %1052 = vmatpush1.bf16.msra.mxu0 %v987
    %1053 = vmatprep.subr.bf16.mxu0 %v990
    %1054 = vmatpush1.bf16.msra.mxu0 %v989
    %1055 = vmatprep.subr.bf16.mxu0 %v992
    %1056 = vmatpush1.bf16.msra.mxu0 %v991
    %1057 = vmatprep.subr.bf16.mxu0 %v994
    %1058 = vmatpush1.bf16.msra.mxu0 %v993
    %1059 = vmatprep.subr.bf16.mxu0 %v996
    %1060 = vmatpush1.bf16.msra.mxu0 %v995
    %1061 = vmatprep.mubr.bf16.mxu0 %v824
    %1062 = vmatmul.mubr.bf16.gmra.mrb[0].mxu0 %v823
    %v1063 = vpop.f32.mrb[0].mxu0
    %v1064 = vadd.f32 %v862, %v1063
    %v1065 = vpop.f32.mrb[0].mxu0
    %v1066 = vadd.f32 %v866, %v1065
    %v1067 = vpop.f32.mrb[0].mxu0
    %v1068 = vpop.f32.mrb[0].mxu0
    %1069 = vdwg.mxu0
    %v1070 = vpack.c.bf16 %v1064, %v1064
    %v1071 = vpack.c.bf16 %v1066, %v1066
    %v1072 = vld [vmem:[#allocation8] sm:$0xff]
    %v1073 = vld [vmem:[#allocation8 + $0x8] sm:$0xff]
    %v1074 = vld [vmem:[#allocation8 + $0x10] sm:$0xff]
    %v1075 = vld [vmem:[#allocation8 + $0x18] sm:$0xff]
    %v1076 = vld [vmem:[#allocation8 + $0x20] sm:$0xff]
    %v1077 = vld [vmem:[#allocation8 + $0x28] sm:$0xff]
    %v1078 = vld [vmem:[#allocation8 + $0x30] sm:$0xff]
    %v1079 = vld [vmem:[#allocation8 + $0x38] sm:$0xff]
    %v1080 = vld [vmem:[#allocation8 + $0x40] sm:$0xff]
    %v1081 = vld [vmem:[#allocation8 + $0x48] sm:$0xff]
    %v1082 = vld [vmem:[#allocation8 + $0x50] sm:$0xff]
    %v1083 = vld [vmem:[#allocation8 + $0x58] sm:$0xff]
    %v1084 = vld [vmem:[#allocation8 + $0x60] sm:$0xff]
    %v1085 = vld [vmem:[#allocation8 + $0x68] sm:$0xff]
    %v1086 = vld [vmem:[#allocation8 + $0x70] sm:$0xff]
    %v1087 = vld [vmem:[#allocation8 + $0x78] sm:$0xff]
    %v1088 = vld [vmem:[#allocation8 + $0x80] sm:$0xff]
    %v1089 = vld [vmem:[#allocation8 + $0x88] sm:$0xff]
    %v1090 = vld [vmem:[#allocation8 + $0x90] sm:$0xff]
    %v1091 = vld [vmem:[#allocation8 + $0x98] sm:$0xff]
    %v1092 = vld [vmem:[#allocation8 + $0xa0] sm:$0xff]
    %v1093 = vld [vmem:[#allocation8 + $0xa8] sm:$0xff]
    %v1094 = vld [vmem:[#allocation8 + $0xb0] sm:$0xff]
    %v1095 = vld [vmem:[#allocation8 + $0xb8] sm:$0xff]
    %v1096 = vld [vmem:[#allocation8 + $0xc0] sm:$0xff]
    %v1097 = vld [vmem:[#allocation8 + $0xc8] sm:$0xff]
    %v1098 = vld [vmem:[#allocation8 + $0xd0] sm:$0xff]
    %v1099 = vld [vmem:[#allocation8 + $0xd8] sm:$0xff]
    %v1100 = vld [vmem:[#allocation8 + $0xe0] sm:$0xff]
    %v1101 = vld [vmem:[#allocation8 + $0xe8] sm:$0xff]
    %v1102 = vld [vmem:[#allocation8 + $0xf0] sm:$0xff]
    %v1103 = vld [vmem:[#allocation8 + $0xf8] sm:$0xff]
    %v1104 = vld [vmem:[%s6] sm:$0x3]
    %v1106 = vlaneseq
    %v1107 = vshrl.u32 %v1106, 7
    %v1108 = vsub.s32 0, %v1107
    %v1109 = vrot.slane %v1104, %v1108
    %v1110 = vlaneseq
    %v1111 = vshrl.u32 %v1110, 7
    %v1112 = vsub.s32 1, %v1111
    %v1113 = vrot.slane %v1104, %v1112
    %v1148 = vunpack.c.l.b16 %v1072
    %v1149 = vunpack.c.h.b16 %v1072
    %v1150 = vunpack.c.l.b16 %v1073
    %v1151 = vunpack.c.h.b16 %v1073
    %v1152 = vunpack.c.l.b16 %v1074
    %v1153 = vunpack.c.h.b16 %v1074
    %v1154 = vunpack.c.l.b16 %v1075
    %v1155 = vunpack.c.h.b16 %v1075
    %v1156 = vunpack.c.l.b16 %v1076
    %v1157 = vunpack.c.h.b16 %v1076
    %v1158 = vunpack.c.l.b16 %v1077
    %v1159 = vunpack.c.h.b16 %v1077
    %v1160 = vunpack.c.l.b16 %v1078
    %v1161 = vunpack.c.h.b16 %v1078
    %v1162 = vunpack.c.l.b16 %v1079
    %v1163 = vunpack.c.h.b16 %v1079
    %v1164 = vunpack.c.l.b16 %v1080
    %v1165 = vunpack.c.h.b16 %v1080
    %v1166 = vunpack.c.l.b16 %v1081
    %v1167 = vunpack.c.h.b16 %v1081
    %v1168 = vunpack.c.l.b16 %v1082
    %v1169 = vunpack.c.h.b16 %v1082
    %v1170 = vunpack.c.l.b16 %v1083
    %v1171 = vunpack.c.h.b16 %v1083
    %v1172 = vunpack.c.l.b16 %v1084
    %v1173 = vunpack.c.h.b16 %v1084
    %v1174 = vunpack.c.l.b16 %v1085
    %v1175 = vunpack.c.h.b16 %v1085
    %v1176 = vunpack.c.l.b16 %v1086
    %v1177 = vunpack.c.h.b16 %v1086
    %v1178 = vunpack.c.l.b16 %v1087
    %v1179 = vunpack.c.h.b16 %v1087
    %v1180 = vunpack.c.l.b16 %v1088
    %v1181 = vunpack.c.h.b16 %v1088
    %v1182 = vunpack.c.l.b16 %v1089
    %v1183 = vunpack.c.h.b16 %v1089
    %v1184 = vunpack.c.l.b16 %v1090
    %v1185 = vunpack.c.h.b16 %v1090
    %v1186 = vunpack.c.l.b16 %v1091
    %v1187 = vunpack.c.h.b16 %v1091
    %v1188 = vunpack.c.l.b16 %v1092
    %v1189 = vunpack.c.h.b16 %v1092
    %v1190 = vunpack.c.l.b16 %v1093
    %v1191 = vunpack.c.h.b16 %v1093
    %v1192 = vunpack.c.l.b16 %v1094
    %v1193 = vunpack.c.h.b16 %v1094
    %v1194 = vunpack.c.l.b16 %v1095
    %v1195 = vunpack.c.h.b16 %v1095
    %v1196 = vunpack.c.l.b16 %v1096
    %v1197 = vunpack.c.h.b16 %v1096
    %v1198 = vunpack.c.l.b16 %v1097
    %v1199 = vunpack.c.h.b16 %v1097
    %v1200 = vunpack.c.l.b16 %v1098
    %v1201 = vunpack.c.h.b16 %v1098
    %v1202 = vunpack.c.l.b16 %v1099
    %v1203 = vunpack.c.h.b16 %v1099
    %v1204 = vunpack.c.l.b16 %v1100
    %v1205 = vunpack.c.h.b16 %v1100
    %v1206 = vunpack.c.l.b16 %v1101
    %v1207 = vunpack.c.h.b16 %v1101
    %v1208 = vunpack.c.l.b16 %v1102
    %v1209 = vunpack.c.h.b16 %v1102
    %v1210 = vunpack.c.l.b16 %v1103
    %v1211 = vunpack.c.h.b16 %v1103
    %v1212 = vpack.c.b16 %v1150, %v1148
    %v1213 = vpack.c.b16 %v1151, %v1149
    %v1214 = vpack.c.b16 %v1154, %v1152
    %v1215 = vpack.c.b16 %v1155, %v1153
    %v1216 = vpack.c.b16 %v1158, %v1156
    %v1217 = vpack.c.b16 %v1159, %v1157
    %v1218 = vpack.c.b16 %v1162, %v1160
    %v1219 = vpack.c.b16 %v1163, %v1161
    %v1220 = vpack.c.b16 %v1166, %v1164
    %v1221 = vpack.c.b16 %v1167, %v1165
    %v1222 = vpack.c.b16 %v1170, %v1168
    %v1223 = vpack.c.b16 %v1171, %v1169
    %v1224 = vpack.c.b16 %v1174, %v1172
    %v1225 = vpack.c.b16 %v1175, %v1173
    %v1226 = vpack.c.b16 %v1178, %v1176
    %v1227 = vpack.c.b16 %v1179, %v1177
    %v1228 = vpack.c.b16 %v1182, %v1180
    %v1229 = vpack.c.b16 %v1183, %v1181
    %v1230 = vpack.c.b16 %v1186, %v1184
    %v1231 = vpack.c.b16 %v1187, %v1185
    %v1232 = vpack.c.b16 %v1190, %v1188
    %v1233 = vpack.c.b16 %v1191, %v1189
    %v1234 = vpack.c.b16 %v1194, %v1192
    %v1235 = vpack.c.b16 %v1195, %v1193
    %v1236 = vpack.c.b16 %v1198, %v1196
    %v1237 = vpack.c.b16 %v1199, %v1197
    %v1238 = vpack.c.b16 %v1202, %v1200
    %v1239 = vpack.c.b16 %v1203, %v1201
    %v1240 = vpack.c.b16 %v1206, %v1204
    %v1241 = vpack.c.b16 %v1207, %v1205
    %v1242 = vpack.c.b16 %v1210, %v1208
    %v1243 = vpack.c.b16 %v1211, %v1209
    %1276 = vmatprep.subr.bf16.mxu0 %v1213
    %1277 = vmatpush1.bf16.msra.mxu0 %v1212
    %1278 = vmatprep.subr.bf16.mxu0 %v1215
    %1279 = vmatpush1.bf16.msra.mxu0 %v1214
    %1280 = vmatprep.subr.bf16.mxu0 %v1217
    %1281 = vmatpush1.bf16.msra.mxu0 %v1216
    %1282 = vmatprep.subr.bf16.mxu0 %v1219
    %1283 = vmatpush1.bf16.msra.mxu0 %v1218
    %1284 = vmatprep.subr.bf16.mxu0 %v1221
    %1285 = vmatpush1.bf16.msra.mxu0 %v1220
    %1286 = vmatprep.subr.bf16.mxu0 %v1223
    %1287 = vmatpush1.bf16.msra.mxu0 %v1222
    %1288 = vmatprep.subr.bf16.mxu0 %v1225
    %1289 = vmatpush1.bf16.msra.mxu0 %v1224
    %1290 = vmatprep.subr.bf16.mxu0 %v1227
    %1291 = vmatpush1.bf16.msra.mxu0 %v1226
    %1292 = vmatprep.subr.bf16.mxu0 %v1229
    %1293 = vmatpush1.bf16.msra.mxu0 %v1228
    %1294 = vmatprep.subr.bf16.mxu0 %v1231
    %1295 = vmatpush1.bf16.msra.mxu0 %v1230
    %1296 = vmatprep.subr.bf16.mxu0 %v1233
    %1297 = vmatpush1.bf16.msra.mxu0 %v1232
    %1298 = vmatprep.subr.bf16.mxu0 %v1235
    %1299 = vmatpush1.bf16.msra.mxu0 %v1234
    %1300 = vmatprep.subr.bf16.mxu0 %v1237
    %1301 = vmatpush1.bf16.msra.mxu0 %v1236
    %1302 = vmatprep.subr.bf16.mxu0 %v1239
    %1303 = vmatpush1.bf16.msra.mxu0 %v1238
    %1304 = vmatprep.subr.bf16.mxu0 %v1241
    %1305 = vmatpush1.bf16.msra.mxu0 %v1240
    %1306 = vmatprep.subr.bf16.mxu0 %v1243
    %1307 = vmatpush1.bf16.msra.mxu0 %v1242
    %1308 = vmatprep.mubr.bf16.mxu0 %v1071
    %1309 = vmatmul.mubr.bf16.gmra.mrb[0].mxu0 %v1070
    %v1310 = vpop.f32.mrb[0].mxu0
    %v1311 = vadd.f32 %v1109, %v1310
    %v1312 = vpop.f32.mrb[0].mxu0
    %v1313 = vadd.f32 %v1113, %v1312
    %v1314 = vpop.f32.mrb[0].mxu0
    %v1315 = vpop.f32.mrb[0].mxu0
    %1316 = vdwg.mxu0
    %v1317 = vpack.c.bf16 %v1311, %v1311
    %v1318 = vpack.c.bf16 %v1313, %v1313
    %v1319 = vld [vmem:[#allocation10] sm:$0xf]
    %v1320 = vld [vmem:[#allocation10 + $0x4] sm:$0xf]
    %v1321 = vld [vmem:[#allocation10 + $0x8] sm:$0xf]
    %v1322 = vld [vmem:[#allocation10 + $0xc] sm:$0xf]
    %v1323 = vld [vmem:[#allocation10 + $0x10] sm:$0xf]
    %v1324 = vld [vmem:[#allocation10 + $0x14] sm:$0xf]
    %v1325 = vld [vmem:[#allocation10 + $0x18] sm:$0xf]
    %v1326 = vld [vmem:[#allocation10 + $0x1c] sm:$0xf]
    %v1327 = vld [vmem:[#allocation10 + $0x20] sm:$0xf]
    %v1328 = vld [vmem:[#allocation10 + $0x24] sm:$0xf]
    %v1329 = vld [vmem:[#allocation10 + $0x28] sm:$0xf]
    %v1330 = vld [vmem:[#allocation10 + $0x2c] sm:$0xf]
    %v1331 = vld [vmem:[#allocation10 + $0x30] sm:$0xf]
    %v1332 = vld [vmem:[#allocation10 + $0x34] sm:$0xf]
    %v1333 = vld [vmem:[#allocation10 + $0x38] sm:$0xf]
    %v1334 = vld [vmem:[#allocation10 + $0x3c] sm:$0xf]
    %v1335 = vld [vmem:[#allocation10 + $0x40] sm:$0xf]
    %v1336 = vld [vmem:[#allocation10 + $0x44] sm:$0xf]
    %v1337 = vld [vmem:[#allocation10 + $0x48] sm:$0xf]
    %v1338 = vld [vmem:[#allocation10 + $0x4c] sm:$0xf]
    %v1339 = vld [vmem:[#allocation10 + $0x50] sm:$0xf]
    %v1340 = vld [vmem:[#allocation10 + $0x54] sm:$0xf]
    %v1341 = vld [vmem:[#allocation10 + $0x58] sm:$0xf]
    %v1342 = vld [vmem:[#allocation10 + $0x5c] sm:$0xf]
    %v1343 = vld [vmem:[#allocation10 + $0x60] sm:$0xf]
    %v1344 = vld [vmem:[#allocation10 + $0x64] sm:$0xf]
    %v1345 = vld [vmem:[#allocation10 + $0x68] sm:$0xf]
    %v1346 = vld [vmem:[#allocation10 + $0x6c] sm:$0xf]
    %v1347 = vld [vmem:[#allocation10 + $0x70] sm:$0xf]
    %v1348 = vld [vmem:[#allocation10 + $0x74] sm:$0xf]
    %v1349 = vld [vmem:[#allocation10 + $0x78] sm:$0xf]
    %v1350 = vld [vmem:[#allocation10 + $0x7c] sm:$0xf]
    %v1351 = vld [vmem:[%s8] sm:$0x1]
    %v1353 = vlaneseq
    %v1354 = vshrl.u32 %v1353, 7
    %v1355 = vsub.s32 0, %v1354
    %v1356 = vrot.slane %v1351, %v1355
    %v1390 = vunpack.c.l.b16 %v1319
    %v1391 = vunpack.c.l.b16 %v1320
    %v1392 = vunpack.c.l.b16 %v1321
    %v1393 = vunpack.c.l.b16 %v1322
    %v1394 = vunpack.c.l.b16 %v1323
    %v1395 = vunpack.c.l.b16 %v1324
    %v1396 = vunpack.c.l.b16 %v1325
    %v1397 = vunpack.c.l.b16 %v1326
    %v1398 = vunpack.c.l.b16 %v1327
    %v1399 = vunpack.c.l.b16 %v1328
    %v1400 = vunpack.c.l.b16 %v1329
    %v1401 = vunpack.c.l.b16 %v1330
    %v1402 = vunpack.c.l.b16 %v1331
    %v1403 = vunpack.c.l.b16 %v1332
    %v1404 = vunpack.c.l.b16 %v1333
    %v1405 = vunpack.c.l.b16 %v1334
    %v1406 = vunpack.c.l.b16 %v1335
    %v1407 = vunpack.c.l.b16 %v1336
    %v1408 = vunpack.c.l.b16 %v1337
    %v1409 = vunpack.c.l.b16 %v1338
    %v1410 = vunpack.c.l.b16 %v1339
    %v1411 = vunpack.c.l.b16 %v1340
    %v1412 = vunpack.c.l.b16 %v1341
    %v1413 = vunpack.c.l.b16 %v1342
    %v1414 = vunpack.c.l.b16 %v1343
    %v1415 = vunpack.c.l.b16 %v1344
    %v1416 = vunpack.c.l.b16 %v1345
    %v1417 = vunpack.c.l.b16 %v1346
    %v1418 = vunpack.c.l.b16 %v1347
    %v1419 = vunpack.c.l.b16 %v1348
    %v1420 = vunpack.c.l.b16 %v1349
    %v1421 = vunpack.c.l.b16 %v1350
    %v1422 = vpack.c.b16 %v1391, %v1390
    %v1423 = vpack.c.b16 %v1393, %v1392
    %v1424 = vpack.c.b16 %v1395, %v1394
    %v1425 = vpack.c.b16 %v1397, %v1396
    %v1426 = vpack.c.b16 %v1399, %v1398
    %v1427 = vpack.c.b16 %v1401, %v1400
    %v1428 = vpack.c.b16 %v1403, %v1402
    %v1429 = vpack.c.b16 %v1405, %v1404
    %v1430 = vpack.c.b16 %v1407, %v1406
    %v1431 = vpack.c.b16 %v1409, %v1408
    %v1432 = vpack.c.b16 %v1411, %v1410
    %v1433 = vpack.c.b16 %v1413, %v1412
    %v1434 = vpack.c.b16 %v1415, %v1414
    %v1435 = vpack.c.b16 %v1417, %v1416
    %v1436 = vpack.c.b16 %v1419, %v1418
    %v1437 = vpack.c.b16 %v1421, %v1420
    %1454 = vmatprep.subr.bf16.mxu0 0
    %1455 = vmatpush1.bf16.msra.mxu0 %v1422
    %1456 = vmatprep.subr.bf16.mxu0 0
    %1457 = vmatpush1.bf16.msra.mxu0 %v1423
    %1458 = vmatprep.subr.bf16.mxu0 0
    %1459 = vmatpush1.bf16.msra.mxu0 %v1424
    %1460 = vmatprep.subr.bf16.mxu0 0
    %1461 = vmatpush1.bf16.msra.mxu0 %v1425
    %1462 = vmatprep.subr.bf16.mxu0 0
    %1463 = vmatpush1.bf16.msra.mxu0 %v1426
    %1464 = vmatprep.subr.bf16.mxu0 0
    %1465 = vmatpush1.bf16.msra.mxu0 %v1427
    %1466 = vmatprep.subr.bf16.mxu0 0
    %1467 = vmatpush1.bf16.msra.mxu0 %v1428
    %1468 = vmatprep.subr.bf16.mxu0 0
    %1469 = vmatpush1.bf16.msra.mxu0 %v1429
    %1470 = vmatprep.subr.bf16.mxu0 0
    %1471 = vmatpush1.bf16.msra.mxu0 %v1430
    %1472 = vmatprep.subr.bf16.mxu0 0
    %1473 = vmatpush1.bf16.msra.mxu0 %v1431
    %1474 = vmatprep.subr.bf16.mxu0 0
    %1475 = vmatpush1.bf16.msra.mxu0 %v1432
    %1476 = vmatprep.subr.bf16.mxu0 0
    %1477 = vmatpush1.bf16.msra.mxu0 %v1433
    %1478 = vmatprep.subr.bf16.mxu0 0
    %1479 = vmatpush1.bf16.msra.mxu0 %v1434
    %1480 = vmatprep.subr.bf16.mxu0 0
    %1481 = vmatpush1.bf16.msra.mxu0 %v1435
    %1482 = vmatprep.subr.bf16.mxu0 0
    %1483 = vmatpush1.bf16.msra.mxu0 %v1436
    %1484 = vmatprep.subr.bf16.mxu0 0
    %1485 = vmatpush1.bf16.msra.mxu0 %v1437
    %1486 = vmatprep.mubr.bf16.mxu0 %v1318
    %1487 = vmatmul.mubr.bf16.gmra.mrb[0].mxu0 %v1317
    %v1488 = vpop.f32.mrb[0].mxu0
    %v1489 = vadd.f32 %v1356, %v1488
    %v1490 = vpop.f32.mrb[0].mxu0
    %v1491 = vpop.f32.mrb[0].mxu0
    %v1492 = vpop.f32.mrb[0].mxu0
    %1493 = vdwg.mxu0
    %v1494 = vpack.c.bf16 %v1489, %v1489
    %1495 = vst [vmem:[#allocation11] sm:$0xf] %v1494
    // Predicated region
    $region58: #{tpu_custom_call.1} parent=1 // pred_check
      _
    $region59: #{tpu_custom_call.1} parent=1 // pred_check_branch
      %1497 = sbr.rel (0) target = $region61
    $region60: #{tpu_custom_call.1} parent=1 // pred_region
      %s1499 = ssub.s32 64, 64
      %1500 = vsyncadd [#allocation4], %s1499
      %s1502 = sshll.u32 [#allocation11], 4
      %s1503 = int_to_ptr.vmem [resolvable:$true] %s1502
      %1505 = dma.vmem_to_hbm [thread:$0]  %s1503, 64, %s9, [#allocation4]
    $region61: #{tpu_custom_call.1} parent=1 // pred_fallthru
      _
    // Predicated region
    $region62: #{tpu_custom_call.1} parent=1 // pred_check
      _
    $region63: #{tpu_custom_call.1} parent=1 // pred_check_branch
      %1507 = sbr.rel (0) target = $region65
    $region64: #{tpu_custom_call.1} parent=1 // pred_region
      %1508 = dma.done [#allocation4], 64
    $region65: #{tpu_custom_call.1} parent=1 // pred_fallthru
      _
    %1509 = vsyncpa [#allocation3], 1
    %1510 = vsyncpa [#allocation6], 1
    %1511 = vsyncpa [#allocation9], 1
    %1512 = vsyncpa [#allocation4], 1

</llo_original>
